<compile_context>
chip_gen: v7x
topology: tpu7x:2x2x1
jax: 0.10.0
libtpu: 0.0.40
codegen_flags: <defaults>
</compile_context>

<pallas_src>
import functools

import numpy as np
import jax
import jax.numpy as jnp
from jax.experimental import pallas as pl
from jax.experimental.pallas import tpu as pltpu


# ----------------------------------------------------------------------------
# Adaptive average pooling: fused, chunked Pallas kernel
# ----------------------------------------------------------------------------
@functools.lru_cache(maxsize=None)
def _adaptive_avg_matrix_np(in_size: int, out_size: int) -> np.ndarray:
    """Row-stochastic (out_size, in_size) matrix A with A @ x == PyTorch's exact
    1-D adaptive average pool (windows [floor(i*in/out), ceil((i+1)*in/out)))."""
    a = np.zeros((out_size, in_size), np.float32)
    for i in range(out_size):
        start = (i * in_size) // out_size
        end = -((-(i + 1) * in_size) // out_size)  # ceil division
        a[i, start:end] = 1.0 / float(end - start)
    return a


@functools.lru_cache(maxsize=None)
def _fused_pool_matrix(hin: int, win: int, hout: int, wout: int, p_cols: int):
    """kron(A_h, A_w)^T padded to p_cols output columns (lane-dense).
    Cached so the constant is built & uploaded once per shape."""
    a_h = _adaptive_avg_matrix_np(hin, hout)          # (hout, hin)
    a_w = _adaptive_avg_matrix_np(win, wout)          # (wout, win)
    a = np.kron(a_h, a_w)                             # (hout*wout, hin*win)
    at = np.zeros((hin * win, p_cols), np.float32)    # zero-padded columns
    at[:, :hout * wout] = a.T
    return jnp.asarray(at)


def _fused_pool_kernel(at_ref, x_ref, o_ref):
    # x_ref: (CHUNK, Hin*Win)  at_ref: (Hin*Win, P)  o_ref: (CHUNK, P)
    o_ref[...] = jnp.dot(
        x_ref[...], at_ref[...], preferred_element_type=jnp.float32
    ).astype(o_ref.dtype)


def _choose_chunk(rows: int, k: int, p: int,
                  dtype_bytes: int = 4,
                  vmem_budget: int = 24 * 1024 * 1024) -> int:
    """Largest row-chunk (multiple of 8 sublanes) such that the resident A^T
    plus double-buffered input/output blocks fit the VMEM budget, while keeping
    >= 2 grid steps when possible so megacore (v7x: 2 TCs) can shard the axis."""
    avail = max(vmem_budget - k * p * dtype_bytes, 8 * 2 * (k + p) * dtype_bytes)
    per_row = 2 * (k + p) * dtype_bytes        # double-buffered in + out blocks
    chunk = max(8, (avail // per_row) // 8 * 8)
    # keep at least 2 grid steps (megacore sharding on v7x) when rows allow
    half = max(8, ((rows + 1) // 2 + 7) // 8 * 8)
    return int(min(chunk, half))


def adaptive_avg_pool2d_pallas(x: jnp.ndarray, out_hw) -> jnp.ndarray:
    """x: (N, C, Hin, Win) float32 -> (N, C, Hout, Wout); matches
    F.adaptive_avg_pool2d exactly."""
    n, c, hin, win = x.shape
    hout, wout = out_hw
    k = hin * win
    p = max(128, ((hout * wout + 127) // 128) * 128)   # lane-dense output width
    at = _fused_pool_matrix(hin, win, hout, wout, p)   # (K, P), cached constant

    rows = n * c
    chunk = _choose_chunk(rows, k, p)
    rows_pad = pl.cdiv(rows, chunk) * chunk
    xf = x.reshape(rows, k)
    if rows_pad > rows:
        xf = jnp.pad(xf, ((0, rows_pad - rows), (0, 0)))

    out = pl.pallas_call(
        _fused_pool_kernel,
        out_shape=jax.ShapeDtypeStruct((rows_pad, p), x.dtype),
        grid_spec=pltpu.PrefetchScalarGridSpec(
            num_scalar_prefetch=0,
            grid=(rows_pad // chunk,),
            in_specs=[
                pl.BlockSpec((k, p), lambda i: (0, 0)),       # A^T, grid-invariant
                pl.BlockSpec((chunk, k), lambda i: (i, 0)),   # row chunk of X
            ],
            out_specs=pl.BlockSpec((chunk, p), lambda i: (i, 0)),
        ),
        compiler_params=pltpu.CompilerParams(
            dimension_semantics=("parallel",),
            vmem_limit_bytes=32 * 1024 * 1024,
        ),
    )(at, xf)

    return out[:rows, :hout * wout].reshape(n, c, hout, wout)


# ----------------------------------------------------------------------------
# MultiPersonPoseNet (eval-mode forward, views=None, USE_GT=True)
# ----------------------------------------------------------------------------
class MultiPersonPoseNetPallas:
    def __init__(self, cfg):
        self.num_cand = cfg["MAX_PEOPLE_NUM"]
        self.num_joints = cfg["NUM_JOINTS"]
        self.image_size = cfg["IMAGE_SIZE"]  # (w, h) convention, as in torch code
        self.use_gt = True

        # Parameters declared in the torch __init__ but unused by this forward path
        # (mapping Linear(256, NERF.DIM) and final_layer Conv2d); kept for parity.
        nerf_dim = cfg["NERF_DIM"]
        k1, k2 = jax.random.split(jax.random.PRNGKey(42))
        self.mapping_w = jax.random.normal(k1, (nerf_dim, 256), jnp.float32) * 0.02
        self.mapping_b = jnp.zeros((nerf_dim,), jnp.float32)
        self.final_w = jax.random.normal(
            k2, (nerf_dim, cfg["NUM_DECONV_FILTERS"], 1, 1), jnp.float32) * 0.02
        self.final_b = jnp.zeros((nerf_dim,), jnp.float32)

    def __call__(self, input_heatmaps, meta):
        # views=None path: backbone is skipped, all_heatmaps = input_heatmaps.
        # TODO(synk): backbone / CuboidProposalNet / NerfMethodNet / NeRF model and
        #             the loss criteria are external modules not provided in source.
        all_heatmaps = input_heatmaps                       # list of (B, J, Hh, Hw)
        batch_size = all_heatmaps[0].shape[0]
        nview = len(all_heatmaps)
        w, h = self.image_size

        # feats2d = [F.adaptive_avg_pool2d(feat, (h, w)) for feat in all_heatmaps]
        # -> all views pooled in one fused Pallas call (channels chunked per step)
        stacked = jnp.stack(all_heatmaps, axis=0)           # (nview, B, J, Hh, Hw)
        pooled = adaptive_avg_pool2d_pallas(
            stacked.reshape(nview * batch_size, self.num_joints,
                            stacked.shape[-2], stacked.shape[-1]),
            (h, w))
        feats2d = [f for f in pooled.reshape(nview, batch_size, self.num_joints, h, w)]

        # USE_GT grid_centers
        roots = meta["roots_3d"].astype(jnp.float32)        # (B, num_cand, 3)
        num_person = meta["num_person"]                     # (B,) int32
        cand = jnp.arange(self.num_cand, dtype=jnp.float32)
        m = cand[None, :] < num_person[:, None].astype(jnp.float32)      # (B, num_cand)
        col3 = jnp.where(m, jnp.broadcast_to(cand[None, :], m.shape), -1.0)
        col4 = jnp.where(m, 1.0, 0.0)
        grid_centers = jnp.concatenate(
            [roots, col3[..., None], col4[..., None]], axis=-1)          # (B, num_cand, 5)

        # pred assembly
        pred = jnp.zeros((batch_size, self.num_cand, self.num_joints, 5), jnp.float32)
        pred = pred.at[:, :, :, 3:].set(
            grid_centers[:, :, 3:].reshape(batch_size, -1, 1, 2))
        # TODO(synk): PoseRegressionNet not provided; pred[:, :, :, 0:3] remains zero.

        # Eval-mode torch forward returns (pred, all_heatmaps, grid_centers);
        # feats2d is returned additionally so the Pallas pooling result is verifiable.
        return pred, all_heatmaps, grid_centers, feats2d


# ----------------------------------------------------------------------------
if __name__ == "__main__":
    key = jax.random.PRNGKey(0)
    B, nview, J, Hh, Hw = 2, 3, 15, 16, 16
    cfg = dict(
        MAX_PEOPLE_NUM=10,
        NUM_JOINTS=J,
        IMAGE_SIZE=(12, 8),   # (w, h) -> pooled spatial = (h=8, w=12)
        NERF_DIM=8,
        NUM_DECONV_FILTERS=32,
    )

    k_hm, k_root = jax.random.split(key)
    heatmaps = [
        jax.random.uniform(jax.random.fold_in(k_hm, v), (B, J, Hh, Hw), jnp.float32)
        for v in range(nview)
    ]
    meta = {
        "roots_3d": jax.random.normal(k_root, (B, cfg["MAX_PEOPLE_NUM"], 3), jnp.float32) * 100.0,
        "num_person": jnp.array([3, 1], jnp.int32),
    }

    model = MultiPersonPoseNetPallas(cfg)
    pred, all_heatmaps, grid_centers, feats2d = model(heatmaps, meta)
    jax.block_until_ready((pred, grid_centers, feats2d))

    # Verify the Pallas adaptive-avg-pool against an XLA reference.
    a_h = jnp.asarray(_adaptive_avg_matrix_np(Hh, 8))
    a_w = jnp.asarray(_adaptive_avg_matrix_np(Hw, 12))
    for v in range(nview):
        ref = jnp.einsum("ok,bjkw,pw->bjop", a_h, heatmaps[v], a_w)
        assert jnp.allclose(feats2d[v], ref, atol=1e-5), f"pooling mismatch view {v}"
    assert pred.shape == (B, cfg["MAX_PEOPLE_NUM"], J, 5)
    assert grid_centers.shape == (B, cfg["MAX_PEOPLE_NUM"], 5)
    # first batch has 3 people, second has 1
    assert float(grid_centers[0, 2, 4]) == 1.0 and float(grid_centers[0, 3, 4]) == 0.0
    assert float(grid_centers[1, 0, 3]) == 0.0 and float(grid_centers[1, 1, 3]) == -1.0

    print("KERNEL_OK")
</pallas_src>

<mosaic_0001>
module attributes {stable_mosaic.version = 11 : i64} {
  func.func @_fused_pool_kernel(%arg0: i32, %arg1: memref<256x128xf32, #tpu.memory_space<vmem>>, %arg2: memref<48x256xf32, #tpu.memory_space<vmem>>, %arg3: memref<48x128xf32, #tpu.memory_space<vmem>>) attributes {dimension_semantics = [#tpu.dimension_semantics<parallel>], iteration_bounds = array<i64: 2>, scalar_prefetch = 0 : i64, scratch_operands = 0 : i64, tpu.core_type = #tpu.core_type<tc>, window_params = [{pipeline_mode = #tpu.pipeline_mode<synchronous>, transform_indices = @transform_0, window_bounds = array<i64: 256, 128>}, {transform_indices = @transform_1, window_bounds = array<i64: 48, 256>}, {transform_indices = @transform_2, window_bounds = array<i64: 48, 128>}]} {
    %c0 = arith.constant 0 : index
    %c0_0 = arith.constant 0 : index
    %0 = vector.load %arg2[%c0, %c0_0] : memref<48x256xf32, #tpu.memory_space<vmem>>, vector<48x256xf32>
    %c0_1 = arith.constant 0 : index
    %c0_2 = arith.constant 0 : index
    %1 = vector.load %arg1[%c0_1, %c0_2] : memref<256x128xf32, #tpu.memory_space<vmem>>, vector<256x128xf32>
    %cst = arith.constant dense<0.000000e+00> : vector<48x128xf32>
    %2 = tpu.matmul %0, %1, %cst {dimension_numbers = #tpu.dot_dimension_numbers<[1], [0], [0], [1], [0, 0, 1, 1], [], []>} : vector<48x256xf32>, vector<256x128xf32>, vector<48x128xf32> -> vector<48x128xf32>
    %c0_3 = arith.constant 0 : index
    %c0_4 = arith.constant 0 : index
    %3 = vector.load %arg3[%c0_3, %c0_4] : memref<48x128xf32, #tpu.memory_space<vmem>>, vector<48x128xf32>
    tpu.vector_store %arg3[%c0_3, %c0_4], %2 {strides = array<i32>} : memref<48x128xf32, #tpu.memory_space<vmem>>, vector<48x128xf32>,
    return
  }
  func.func @transform_0(%arg0: i32) -> (i32, i32) {
    %c0_i32 = arith.constant 0 : i32
    %c0_i32_0 = arith.constant 0 : i32
    %c0_i32_1 = arith.constant 0 : i32
    return %c0_i32, %c0_i32_0 : i32, i32
  }
  func.func @transform_1(%arg0: i32) -> (i32, i32) {
    %c0_i32 = arith.constant 0 : i32
    %c0_i32_0 = arith.constant 0 : i32
    return %arg0, %c0_i32 : i32, i32
  }
  func.func @transform_2(%arg0: i32) -> (i32, i32) {
    %c0_i32 = arith.constant 0 : i32
    %c0_i32_0 = arith.constant 0 : i32
    return %arg0, %c0_i32 : i32, i32
  }
}

</mosaic_0001>

<llo_original>
// kernel: tpu_custom_call.1
$region0: #{tpu_custom_call.1}
  #allocation0 [shape = 'u32[]', space=smem, size = 0x4, offset = 0x4, fixed_abs, tag = 'smem constant byte address 0x4 - core index']
  #allocation1 [shape = 'u32[144,128]{1,0:T(1,128)}', space=vmem, size = 0x12000, scoped, tag = 'internal scratch']
  %s0 = inlined_call_operand.hbm [shape: f32[256,128], index: 0, kind: input, shape index: {}]
  %s1 = inlined_call_operand.hbm [shape: f32[96,256], index: 1, kind: input, shape index: {}]
  %s2 = inlined_call_operand.hbm [shape: f32[96,128], index: 2, kind: output, shape index: {}]
  %s3 = sld [smem:[#allocation0]]
  $region49: #{tpu_custom_call.1} parent=0
    _
  %s5 = ssub.s32 1, %s3
  %s6 = scalar_select 0, %s5, %s3
  $region1: #{tpu_custom_call.1} parent=0
    #allocation2 [shape = 'u8[131072]{0}', space=vmem, size = 0x20000, scoped, tag = 'input window, operand 0, single buffered']
    #allocation3 [shape = 's32[2]{0}', space=sflag, size = 0x8, scoped, tag = 'scoped memory for tpu_custom_call.1']
    #allocation4 [shape = 's32[2]{0}', space=sflag, size = 0x8, scoped, tag = 'scoped memory for tpu_custom_call.1']
    #allocation5 [shape = 'u8[98304]{0}', space=vmem, size = 0x18000, scoped, tag = 'input window, operand 1']
    #allocation6 [shape = 's32[2]{0}', space=sflag, size = 0x8, scoped, tag = 'scoped memory for tpu_custom_call.1']
    #allocation7 [shape = 'u8[49152]{0}', space=vmem, size = 0xc000, scoped, tag = 'output window, operand 0']
    %7 = vsyncpa [#allocation3], 0
    %8 = vsyncpa [#allocation6], 0
    %s9 = scalar_lea.sflag [#allocation6], 1
    %10 = vsyncpa %s9, 0
    %11 = vsyncpa [#allocation4], 0
    %s12 = scalar_lea.sflag [#allocation4], 1
    %13 = vsyncpa %s12, 0
    loop: start=0, step=1, limit=4
    $region2: #{tpu_custom_call.1} parent=1 // loop_pre_header
      _
    $region3: #{tpu_custom_call.1} parent=1 // loop_header
      %s15 = sphi 0, %s19
      %p16 = scmp.ge.s32.totalorder %s15, 4
      %s23 = sphi 0, %s23
      %s25 = sphi 0, %s23
      %s26 = sphi 0, %s25
      %s40 = sphi 0, %s26
      %s46 = sphi 0, %s48
      %s49 = sphi 0, %s46
      %s50 = sphi 0, %s49
      %s66 = sphi 0, %s50
      %s72 = sphi 0, %s74
      %s75 = sphi 0, %s72
      %s76 = sphi 0, %s75
      %s92 = sphi 0, %s76
    $region4: #{tpu_custom_call.1} parent=1 // loop_header_branch
      %18 = sbr.rel (%p16) target = $region8
    $region5: #{tpu_custom_call.1} parent=1 // loop_body
      %s20 = ssub.s32 %s15, 1
      %s21 = ssub.s32 %s15, 2
      %s22 = sadd.s32 %s15, 1
      %s24 = sadd.s32 %s23, 1
      %p27 = scmp.eq.s32.totalorder %s15, 1
      %p28 = scmp.ne.s32.totalorder %s23, %s25
      %p29 = scmp.eq.s32.totalorder %s15, 0
      %p30 = por %p28, %p29
      %p31 = scmp.ne.s32.totalorder %s23, %s25
      %p32 = scmp.eq.s32.totalorder %s20, 1
      %p33 = por %p31, %p32
      %p34 = scmp.ne.s32.totalorder %s25, %s26
      %p35 = scmp.eq.s32.totalorder %s20, 0
      %p36 = por %p34, %p35
      %p37 = scmp.ne.s32.totalorder %s25, %s26
      %p38 = scmp.eq.s32.totalorder %s21, 1
      %p39 = por %p37, %p38
      %p41 = scmp.ne.s32.totalorder %s26, %s40
      %p42 = scmp.eq.s32.totalorder %s21, 0
      %p43 = por %p41, %p42
      %s44 = ssub.s32 %s15, %s22
      %p45 = scmp.eq.s32.totalorder %s44, 0
      %s47 = sadd.s32 %s46, 1
      %s48 = scalar_select %p45, %s46, %s47
      %p51 = pneg %p45
      %p52 = scmp.eq.s32.totalorder %s15, 1
      %p53 = por %p51, %p52
      %p54 = scmp.ne.s32.totalorder %s46, %s49
      %p55 = scmp.eq.s32.totalorder %s15, 0
      %p56 = por %p54, %p55
      %p57 = scmp.ne.s32.totalorder %s46, %s49
      %p58 = scmp.eq.s32.totalorder %s20, 1
      %p59 = por %p57, %p58
      %p60 = scmp.ne.s32.totalorder %s49, %s50
      %p61 = scmp.eq.s32.totalorder %s20, 0
      %p62 = por %p60, %p61
      %p63 = scmp.ne.s32.totalorder %s49, %s50
      %p64 = scmp.eq.s32.totalorder %s21, 1
      %p65 = por %p63, %p64
      %p67 = scmp.ne.s32.totalorder %s50, %s66
      %p68 = scmp.eq.s32.totalorder %s21, 0
      %p69 = por %p67, %p68
      %s70 = ssub.s32 %s15, %s22
      %p71 = scmp.eq.s32.totalorder %s70, 0
      %s73 = sadd.s32 %s72, 1
      %s74 = scalar_select %p71, %s72, %s73
      %p77 = pneg %p71
      %p78 = scmp.eq.s32.totalorder %s15, 1
      %p79 = por %p77, %p78
      %p80 = scmp.ne.s32.totalorder %s72, %s75
      %p81 = scmp.eq.s32.totalorder %s15, 0
      %p82 = por %p80, %p81
      %p83 = scmp.ne.s32.totalorder %s72, %s75
      %p84 = scmp.eq.s32.totalorder %s20, 1
      %p85 = por %p83, %p84
      %p86 = scmp.ne.s32.totalorder %s75, %s76
      %p87 = scmp.eq.s32.totalorder %s20, 0
      %p88 = por %p86, %p87
      %p89 = scmp.ne.s32.totalorder %s75, %s76
      %p90 = scmp.eq.s32.totalorder %s21, 1
      %p91 = por %p89, %p90
      %p93 = scmp.ne.s32.totalorder %s76, %s92
      %p94 = scmp.eq.s32.totalorder %s21, 0
      %p95 = por %p93, %p94
      %p96 = scmp.le.s32.totalorder 1, %s15
      %p97 = scmp.lt.s32.totalorder %s15, 3
      %p98 = pnand %p96, %p97
      %p99 = pneg %p98
      // Predicated region
      $region9: #{tpu_custom_call.1} parent=5 // pred_check
        _
      $region10: #{tpu_custom_call.1} parent=5 // pred_check_branch
        %101 = sbr.rel (%p98) target = $region12
      $region11: #{tpu_custom_call.1} parent=5 // pred_region
        %s102 = ssub.s32 %s15, 1
        // Predicated region
        $region13: #{tpu_custom_call.1} parent=11 // pred_check
          %p103 = pneg %p36
        $region14: #{tpu_custom_call.1} parent=11 // pred_check_branch
          %105 = sbr.rel (%p103) target = $region16
        $region15: #{tpu_custom_call.1} parent=11 // pred_region
          %s107 = ssub.s32 4096, 4096
          %108 = vsyncadd [#allocation3], %s107
          %s109 = sshll.u32 [#allocation2], 4
          %s110 = int_to_ptr.vmem [resolvable:$true] %s109
          %115 = dma.hbm_to_vmem [thread:$0]  %s0, 4096, %s110, [#allocation3], 128, 128, 8
        $region16: #{tpu_custom_call.1} parent=11 // pred_fallthru
          _
      $region12: #{tpu_custom_call.1} parent=5 // pred_fallthru
        _
      %p116 = scmp.lt.s32.totalorder %s15, 2
      // Predicated region
      $region17: #{tpu_custom_call.1} parent=5 // pred_check
        %p117 = pneg %p116
      $region18: #{tpu_custom_call.1} parent=5 // pred_check_branch
        %119 = sbr.rel (%p117) target = $region20
      $region19: #{tpu_custom_call.1} parent=5 // pred_region
        // Predicated region
        $region21: #{tpu_custom_call.1} parent=19 // pred_check
          %p120 = pneg %p56
        $region22: #{tpu_custom_call.1} parent=19 // pred_check_branch
          %122 = sbr.rel (%p120) target = $region24
        $region23: #{tpu_custom_call.1} parent=19 // pred_region
          %s123 = sand.u32 %s46, 1
          %s124 = scalar_lea.sflag [#allocation6], %s123
          %s125 = sand.u32 %s46, 1
          %s126 = smul.addr %s125, 96
          %s127 = scalar_lea.vmem [#allocation5], %s126
          %s128 = smul.u32 6, %s15
          %s130 = ssub.s32 1536, 1536
          %131 = vsyncadd %s124, %s130
          %s132 = smul.addr %s128, 2
          %s133 = smul.addr %s132, 128
          %s134 = scalar_lea.hbm %s1, %s133
          %s135 = sshll.u32 %s127, 4
          %s136 = int_to_ptr.vmem [resolvable:$true] %s135
          %141 = dma.hbm_to_vmem [thread:$0]  %s134, 1536, %s136, %s124, 256, 256, 16
        $region24: #{tpu_custom_call.1} parent=19 // pred_fallthru
          _
      $region20: #{tpu_custom_call.1} parent=5 // pred_fallthru
        _
      %p142 = scmp.le.s32.totalorder 1, %s15
      %p143 = scmp.lt.s32.totalorder %s15, 3
      %p144 = pnand %p142, %p143
      %p145 = pneg %p144
      // Predicated region
      $region25: #{tpu_custom_call.1} parent=5 // pred_check
        _
      $region26: #{tpu_custom_call.1} parent=5 // pred_check_branch
        %147 = sbr.rel (%p144) target = $region28
      $region27: #{tpu_custom_call.1} parent=5 // pred_region
        %s148 = ssub.s32 %s15, 1
        // Predicated region
        $region29: #{tpu_custom_call.1} parent=27 // pred_check
          %p149 = pneg %p36
        $region30: #{tpu_custom_call.1} parent=27 // pred_check_branch
          %151 = sbr.rel (%p149) target = $region32
        $region31: #{tpu_custom_call.1} parent=27 // pred_region
          %152 = dma.done [#allocation3], 4096
        $region32: #{tpu_custom_call.1} parent=27 // pred_fallthru
          _
        %s153 = sand.u32 %s49, 1
        %s154 = scalar_lea.sflag [#allocation6], %s153
        %s155 = sand.u32 %s49, 1
        %s156 = smul.addr %s155, 96
        %s157 = scalar_lea.vmem [#allocation5], %s156
        // Predicated region
        $region33: #{tpu_custom_call.1} parent=27 // pred_check
          %p158 = pneg %p62
        $region34: #{tpu_custom_call.1} parent=27 // pred_check_branch
          %160 = sbr.rel (%p158) target = $region36
        $region35: #{tpu_custom_call.1} parent=27 // pred_region
          %161 = dma.done %s154, 1536
        $region36: #{tpu_custom_call.1} parent=27 // pred_fallthru
          _
        %p162 = pneg %p36
        %p163 = pneg %p33
        %s164 = sand.u32 %s49, 1
        %s165 = scalar_lea.sflag [#allocation6], %s164
        %s166 = sand.u32 %s49, 1
        %s167 = smul.addr %s166, 96
        %s168 = scalar_lea.vmem [#allocation5], %s167
        %p169 = pneg %p62
        %p170 = pneg %p59
        %p171 = pneg %p88
        %p172 = pneg %p85
        %s173 = sand.u32 %s75, 1
        %s174 = scalar_lea.sflag [#allocation4], %s173
        %s175 = sand.u32 %s75, 1
        %s176 = smul.addr %s175, 48
        %s177 = scalar_lea.vmem [#allocation7], %s176
        %s178 = smul.u32 6, %s20
        %s179 = smul.u32 6, %s20
        %v180 = vld [vmem:[%s157] sm:$0xff]
        %v181 = vld [vmem:[%s157 + $0x8] sm:$0xff]
        %v182 = vld [vmem:[%s157 + $0x10] sm:$0xff]
        %v183 = vld [vmem:[%s157 + $0x18] sm:$0xff]
        %v184 = vld [vmem:[%s157 + $0x20] sm:$0xff]
        %v185 = vld [vmem:[%s157 + $0x28] sm:$0xff]
        %v186 = vld [vmem:[%s157 + $0x30] sm:$0xff]
        %v187 = vld [vmem:[%s157 + $0x38] sm:$0xff]
        %v188 = vld [vmem:[%s157 + $0x40] sm:$0xff]
        %v189 = vld [vmem:[%s157 + $0x48] sm:$0xff]
        %v190 = vld [vmem:[%s157 + $0x50] sm:$0xff]
        %v191 = vld [vmem:[%s157 + $0x58] sm:$0xff]
        %v192 = vld [vmem:[#allocation2] sm:$0xff]
        %v193 = vld [vmem:[#allocation2 + $0x8] sm:$0xff]
        %v194 = vld [vmem:[#allocation2 + $0x10] sm:$0xff]
        %v195 = vld [vmem:[#allocation2 + $0x18] sm:$0xff]
        %v196 = vld [vmem:[#allocation2 + $0x20] sm:$0xff]
        %v197 = vld [vmem:[#allocation2 + $0x28] sm:$0xff]
        %v198 = vld [vmem:[#allocation2 + $0x30] sm:$0xff]
        %v199 = vld [vmem:[#allocation2 + $0x38] sm:$0xff]
        %v200 = vld [vmem:[#allocation2 + $0x40] sm:$0xff]
        %v201 = vld [vmem:[#allocation2 + $0x48] sm:$0xff]
        %v202 = vld [vmem:[#allocation2 + $0x50] sm:$0xff]
        %v203 = vld [vmem:[#allocation2 + $0x58] sm:$0xff]
        %v204 = vld [vmem:[#allocation2 + $0x60] sm:$0xff]
        %v205 = vld [vmem:[#allocation2 + $0x68] sm:$0xff]
        %v206 = vld [vmem:[#allocation2 + $0x70] sm:$0xff]
        %v207 = vld [vmem:[#allocation2 + $0x78] sm:$0xff]
        %v208 = vld [vmem:[#allocation2 + $0x80] sm:$0xff]
        %v209 = vld [vmem:[#allocation2 + $0x88] sm:$0xff]
        %v210 = vld [vmem:[#allocation2 + $0x90] sm:$0xff]
        %v211 = vld [vmem:[#allocation2 + $0x98] sm:$0xff]
        %v212 = vld [vmem:[#allocation2 + $0xa0] sm:$0xff]
        %v213 = vld [vmem:[#allocation2 + $0xa8] sm:$0xff]
        %v214 = vld [vmem:[#allocation2 + $0xb0] sm:$0xff]
        %v215 = vld [vmem:[#allocation2 + $0xb8] sm:$0xff]
        %v216 = vld [vmem:[#allocation2 + $0xc0] sm:$0xff]
        %v217 = vld [vmem:[#allocation2 + $0xc8] sm:$0xff]
        %v218 = vld [vmem:[#allocation2 + $0xd0] sm:$0xff]
        %v219 = vld [vmem:[#allocation2 + $0xd8] sm:$0xff]
        %v220 = vld [vmem:[#allocation2 + $0xe0] sm:$0xff]
        %v221 = vld [vmem:[#allocation2 + $0xe8] sm:$0xff]
        %v222 = vld [vmem:[#allocation2 + $0xf0] sm:$0xff]
        %v223 = vld [vmem:[#allocation2 + $0xf8] sm:$0xff]
        %224 = vmatprep.subr.mxu0 0.0
        %225 = vmatpush1.msra.mxu0 %v192
        %226 = vmatprep.subr.mxu0 0.0
        %227 = vmatpush1.msra.mxu0 %v193
        %228 = vmatprep.subr.mxu0 0.0
        %229 = vmatpush1.msra.mxu0 %v194
        %230 = vmatprep.subr.mxu0 0.0
        %231 = vmatpush1.msra.mxu0 %v195
        %232 = vmatprep.subr.mxu0 0.0
        %233 = vmatpush1.msra.mxu0 %v196
        %234 = vmatprep.subr.mxu0 0.0
        %235 = vmatpush1.msra.mxu0 %v197
        %236 = vmatprep.subr.mxu0 0.0
        %237 = vmatpush1.msra.mxu0 %v198
        %238 = vmatprep.subr.mxu0 0.0
        %239 = vmatpush1.msra.mxu0 %v199
        %240 = vmatprep.subr.mxu0 0.0
        %241 = vmatpush1.msra.mxu0 %v200
        %242 = vmatprep.subr.mxu0 0.0
        %243 = vmatpush1.msra.mxu0 %v201
        %244 = vmatprep.subr.mxu0 0.0
        %245 = vmatpush1.msra.mxu0 %v202
        %246 = vmatprep.subr.mxu0 0.0
        %247 = vmatpush1.msra.mxu0 %v203
        %248 = vmatprep.subr.mxu0 0.0
        %249 = vmatpush1.msra.mxu0 %v204
        %250 = vmatprep.subr.mxu0 0.0
        %251 = vmatpush1.msra.mxu0 %v205
        %252 = vmatprep.subr.mxu0 0.0
        %253 = vmatpush1.msra.mxu0 %v206
        %254 = vmatprep.subr.mxu0 0.0
        %255 = vmatpush1.msra.mxu0 %v207
        %256 = vmatprep.subr.mxu0 0.0
        %257 = vmatpush1.msra.mxu0 %v208
        %258 = vmatprep.subr.mxu0 0.0
        %259 = vmatpush1.msra.mxu0 %v209
        %260 = vmatprep.subr.mxu0 0.0
        %261 = vmatpush1.msra.mxu0 %v210
        %262 = vmatprep.subr.mxu0 0.0
        %263 = vmatpush1.msra.mxu0 %v211
        %264 = vmatprep.subr.mxu0 0.0
        %265 = vmatpush1.msra.mxu0 %v212
        %266 = vmatprep.subr.mxu0 0.0
        %267 = vmatpush1.msra.mxu0 %v213
        %268 = vmatprep.subr.mxu0 0.0
        %269 = vmatpush1.msra.mxu0 %v214
        %270 = vmatprep.subr.mxu0 0.0
        %271 = vmatpush1.msra.mxu0 %v215
        %272 = vmatprep.subr.mxu0 0.0
        %273 = vmatpush1.msra.mxu0 %v216
        %274 = vmatprep.subr.mxu0 0.0
        %275 = vmatpush1.msra.mxu0 %v217
        %276 = vmatprep.subr.mxu0 0.0
        %277 = vmatpush1.msra.mxu0 %v218
        %278 = vmatprep.subr.mxu0 0.0
        %279 = vmatpush1.msra.mxu0 %v219
        %280 = vmatprep.subr.mxu0 0.0
        %281 = vmatpush1.msra.mxu0 %v220
        %282 = vmatprep.subr.mxu0 0.0
        %283 = vmatpush1.msra.mxu0 %v221
        %284 = vmatprep.subr.mxu0 0.0
        %285 = vmatpush1.msra.mxu0 %v222
        %286 = vmatprep.subr.mxu0 0.0
        %287 = vmatpush1.msra.mxu0 %v223
        %288 = vmatprep.mubr.f32.mxu0 %v181
        %289 = vmatmul.mubr.f32.gmra.mrb[0].mxu0 %v180
        %v290 = vpop.f32.mrb[0].mxu0
        %v291 = vadd.f32 0.0, %v290
        %v292 = vpop.f32.mrb[0].mxu0
        %293 = vmatprep.mubr.f32.mxu0 %v183
        %294 = vmatmul.mubr.f32.gmra.mrb[0].mxu0 %v182
        %v295 = vpop.f32.mrb[0].mxu0
        %v296 = vadd.f32 0.0, %v295
        %v297 = vpop.f32.mrb[0].mxu0
        %298 = vmatprep.mubr.f32.mxu0 %v185
        %299 = vmatmul.mubr.f32.gmra.mrb[0].mxu0 %v184
        %v300 = vpop.f32.mrb[0].mxu0
        %v301 = vadd.f32 0.0, %v300
        %v302 = vpop.f32.mrb[0].mxu0
        %303 = vmatprep.mubr.f32.mxu0 %v187
        %304 = vmatmul.mubr.f32.gmra.mrb[0].mxu0 %v186
        %v305 = vpop.f32.mrb[0].mxu0
        %v306 = vadd.f32 0.0, %v305
        %v307 = vpop.f32.mrb[0].mxu0
        %308 = vmatprep.mubr.f32.mxu0 %v189
        %309 = vmatmul.mubr.f32.gmra.mrb[0].mxu0 %v188
        %v310 = vpop.f32.mrb[0].mxu0
        %v311 = vadd.f32 0.0, %v310
        %v312 = vpop.f32.mrb[0].mxu0
        %313 = vmatprep.mubr.f32.mxu0 %v191
        %314 = vmatmul.mubr.f32.gmra.mrb[0].mxu0 %v190
        %v315 = vpop.f32.mrb[0].mxu0
        %v316 = vadd.f32 0.0, %v315
        %v317 = vpop.f32.mrb[0].mxu0
        %318 = vdwg.mxu0
        %319 = vst [vmem:[%s177] sm:$0xff] %v291
        %320 = vst [vmem:[%s177 + $0x8] sm:$0xff] %v296
        %321 = vst [vmem:[%s177 + $0x10] sm:$0xff] %v301
        %322 = vst [vmem:[%s177 + $0x18] sm:$0xff] %v306
        %323 = vst [vmem:[%s177 + $0x20] sm:$0xff] %v311
        %324 = vst [vmem:[%s177 + $0x28] sm:$0xff] %v316
        %s325 = sand.u32 %s75, 1
        %s326 = scalar_lea.sflag [#allocation4], %s325
        %s327 = sand.u32 %s75, 1
        %s328 = smul.addr %s327, 48
        %s329 = scalar_lea.vmem [#allocation7], %s328
        // Predicated region
        $region37: #{tpu_custom_call.1} parent=27 // pred_check
          %p330 = pneg %p85
        $region38: #{tpu_custom_call.1} parent=27 // pred_check_branch
          %332 = sbr.rel (%p330) target = $region40
        $region39: #{tpu_custom_call.1} parent=27 // pred_region
          %s333 = smul.u32 6, %s20
          %s335 = ssub.s32 768, 768
          %336 = vsyncadd %s326, %s335
          %s337 = smul.addr %s333, 128
          %s338 = scalar_lea.hbm %s2, %s337
          %s339 = sshll.u32 %s329, 4
          %s340 = int_to_ptr.vmem [resolvable:$true] %s339
          %345 = dma.vmem_to_hbm [thread:$0]  %s340, 768, %s338, %s326, 128, 128, 8
        $region40: #{tpu_custom_call.1} parent=27 // pred_fallthru
          _
      $region28: #{tpu_custom_call.1} parent=5 // pred_fallthru
        _
      %p346 = scmp.le.s32.totalorder 2, %s15
      // Predicated region
      $region41: #{tpu_custom_call.1} parent=5 // pred_check
        %p347 = pneg %p346
      $region42: #{tpu_custom_call.1} parent=5 // pred_check_branch
        %349 = sbr.rel (%p347) target = $region44
      $region43: #{tpu_custom_call.1} parent=5 // pred_region
        %s350 = ssub.s32 %s15, 2
        // Predicated region
        $region45: #{tpu_custom_call.1} parent=43 // pred_check
          %p351 = pneg %p91
        $region46: #{tpu_custom_call.1} parent=43 // pred_check_branch
          %353 = sbr.rel (%p351) target = $region48
        $region47: #{tpu_custom_call.1} parent=43 // pred_region
          %s354 = sand.u32 %s76, 1
          %s355 = scalar_lea.sflag [#allocation4], %s354
          %s356 = sand.u32 %s76, 1
          %s357 = smul.addr %s356, 48
          %s358 = scalar_lea.vmem [#allocation7], %s357
          %359 = dma.done %s355, 768
        $region48: #{tpu_custom_call.1} parent=43 // pred_fallthru
          _
      $region44: #{tpu_custom_call.1} parent=5 // pred_fallthru
        _
    $region6: #{tpu_custom_call.1} parent=1 // loop_footer
      %s19 = sadd.s32 1, %s15
    $region7: #{tpu_custom_call.1} parent=1 // loop_footer_branch
      %14 = sbr.rel target = $region3
    $region8: #{tpu_custom_call.1} parent=1 // loop_exit
      _
    %360 = vsyncpa [#allocation3], 1
    %s361 = scalar_lea.sflag [#allocation3], 1
    %362 = vsyncpa %s361, 1
    %363 = vsyncpa [#allocation6], 1
    %s364 = scalar_lea.sflag [#allocation6], 1
    %365 = vsyncpa %s364, 1
    %366 = vsyncpa [#allocation4], 1
    %s367 = scalar_lea.sflag [#allocation4], 1
    %368 = vsyncpa %s367, 1

</llo_original>
